<compile_context>
chip_gen: v7x
topology: tpu7x:2x2x1
jax: 0.10.0
libtpu: 0.0.40
codegen_flags: <defaults>
</compile_context>

<pallas_src>
import functools

import jax
import jax.numpy as jnp
from jax.experimental import pallas as pl
from jax.experimental.pallas import tpu as pltpu


LANE = 128  # lane width / padded output width of the fused head


# ----------------------------- Pallas kernel -----------------------------

def where_number_kernel(nc, x_ref, pw_ref, pb_ref, wh_ref, bh_ref, out_ref):
    """Fused pooler + classifier head.

    x_ref  : (B, HP)   pre-pooler activations (zero-padded hidden)
    pw_ref : (HP, HP)  pooler dense weight (zero-padded)
    pb_ref : (1, HP)   pooler dense bias  (zero-padded, lane-dense)
    wh_ref : (HP, 128) fused head weight: col 0 = linearPCIQ, cols 1..nc = linearPNCIQ
    bh_ref : (1, 128)  fused head bias   (lane-dense)
    out_ref: (1, 128)  lane-dense output; lanes 1..nc hold log_softmax result
    """
    x = x_ref[...]                                               # (B, HP) f32

    # BERT pooler: dense + tanh (Dropout p=0.1 -> identity in inference mode).
    pooled = jnp.tanh(
        jnp.dot(x, pw_ref[...], preferred_element_type=jnp.float32)
        + pb_ref[...])                                           # (B, HP)

    # Single fused matmul for linearPCIQ (col 0) and linearPNCIQ (cols 1..nc).
    head = jnp.dot(pooled, wh_ref[...],
                   preferred_element_type=jnp.float32) + bh_ref[...]   # (B, 128)

    # linearPCIQ output + softmax over dim=0 (the batch axis).
    pciq = head[:, 0:1]                                          # (B, 1)
    m = jnp.max(pciq, axis=0, keepdims=True)
    e = jnp.exp(pciq - m)
    sm = e * pl.reciprocal(jnp.sum(e, axis=0, keepdims=True), approx=True)  # (B, 1)

    # linearPNCIQ + sigmoid (computed on all 128 lanes; padded lanes masked below).
    sig = jax.nn.sigmoid(head)                                   # (B, 128)

    # torch.matmul(sm_pciq.view(-1), sig_pnciq): (B,) @ (B, NC) -> (NC,)
    res = jnp.sum(sm * sig, axis=0, keepdims=True)               # (1, 128)

    # log_softmax over the NC real lanes (lanes 1..nc); padded lanes masked out.
    lane = jax.lax.broadcasted_iota(jnp.int32, res.shape, 1)     # (1, 128)
    valid = (lane >= 1) & (lane < 1 + nc)
    masked = jnp.where(valid, res, -jnp.inf)
    mr = jnp.max(masked, axis=-1, keepdims=True)
    sh = masked - mr
    lse = jnp.log(jnp.sum(jnp.where(valid, jnp.exp(sh), 0.0),
                          axis=-1, keepdims=True))
    out_ref[...] = jnp.where(valid, sh - lse, 0.0)               # (1, 128) lane-dense


def where_number_forward(pre_pooled, pool_w, pool_b, w1, b1, w2, b2, nc):
    """Pad/fuse weights in the wrapper and run the whole head in one pallas_call.

    pre_pooled: (B, H) pre-pooler activations from the encoder stub.
    pool_w/pool_b: BERT pooler dense params, (H, H) / (H,).
    w1/b1: linearPCIQ as (H, 1) / (1, 1)      (x @ W + b convention).
    w2/b2: linearPNCIQ as (H, NC) / (1, NC).
    Returns (NC,) log_softmax result, matching the PyTorch module.
    """
    B, H = pre_pooled.shape
    HP = ((H + LANE - 1) // LANE) * LANE                         # hidden padded to 128
    assert 1 + nc <= LANE

    f32 = jnp.float32
    # Zero-pad the hidden axis so every vector load/matmul is lane-dense.
    x_p = jnp.pad(pre_pooled.astype(f32), ((0, 0), (0, HP - H)))            # (B, HP)
    pw_p = jnp.pad(pool_w.astype(f32), ((0, HP - H), (0, HP - H)))          # (HP, HP)
    pb_p = jnp.pad(pool_b.astype(f32).reshape(1, H), ((0, 0), (0, HP - H)))  # (1, HP)

    # Fuse the two head linears into one lane-padded (HP, 128) weight + bias.
    w_head = jnp.zeros((HP, LANE), f32)
    w_head = w_head.at[:H, 0:1].set(w1.astype(f32))
    w_head = w_head.at[:H, 1:1 + nc].set(w2.astype(f32))
    b_head = jnp.zeros((1, LANE), f32)
    b_head = b_head.at[:, 0:1].set(b1.astype(f32).reshape(1, 1))
    b_head = b_head.at[:, 1:1 + nc].set(b2.astype(f32).reshape(1, nc))

    vmem = pl.BlockSpec(memory_space=pltpu.MemorySpace.VMEM)
    out = pl.pallas_call(
        functools.partial(where_number_kernel, nc),
        out_shape=jax.ShapeDtypeStruct((1, LANE), jnp.float32),
        in_specs=[vmem] * 5,
        out_specs=vmem,
    )(x_p, pw_p, pb_p, w_head, b_head)

    return out[0, 1:1 + nc]                                      # (NC,) like torch


# --------------------------- BERT stub (plain JAX) ---------------------------

def bert_stub_pre_pooler(input_ids, attention_mask, token_type_ids, params):
    """Deterministic stand-in producing PRE-pooler activations of shape (B, H).

    (The pooler dense + tanh are fused into the Pallas kernel.)
    """
    emb = params["tok_emb"][input_ids]                           # (B, S, H)
    emb = emb + params["type_emb"][token_type_ids]               # (B, S, H)
    mask = attention_mask.astype(jnp.float32)[..., None]         # (B, S, 1)
    return jnp.sum(emb * mask, axis=1) / jnp.maximum(
        jnp.sum(mask, axis=1), 1.0)                              # (B, H)


# ----------------------- pure-JAX reference (for checking) -----------------------

def reference_head(pre_pooled, pool_w, pool_b, w1, b1, w2, b2):
    pooled = jnp.tanh(pre_pooled @ pool_w + pool_b)              # (B, H)
    pciq = pooled @ w1 + b1                                      # (B, 1)
    sm = jax.nn.softmax(pciq, axis=0)                            # (B, 1)
    sig = jax.nn.sigmoid(pooled @ w2 + b2)                       # (B, NC)
    res = sm.reshape(-1) @ sig                                   # (NC,)
    return jax.nn.log_softmax(res, axis=0)


# --------------------------------- main ---------------------------------

if __name__ == "__main__":
    B, S, H, NC, VOCAB = 8, 16, 32, 4, 100  # NC == NUM_MAX_CONDITIONS

    key = jax.random.PRNGKey(0)
    keys = jax.random.split(key, 8)

    # deterministic synthetic "checkpoint"
    params = {
        "tok_emb":  0.02 * jax.random.normal(keys[0], (VOCAB, H), jnp.float32),
        "type_emb": 0.02 * jax.random.normal(keys[1], (2, H), jnp.float32),
        "pool_w":   0.05 * jax.random.normal(keys[2], (H, H), jnp.float32),
        "pool_b":   jnp.zeros((H,), jnp.float32),
    }
    w1 = 0.1 * jax.random.normal(keys[3], (H, 1), jnp.float32)    # linearPCIQ
    b1 = jnp.zeros((1, 1), jnp.float32)
    w2 = 0.1 * jax.random.normal(keys[4], (H, NC), jnp.float32)   # linearPNCIQ
    b2 = jnp.zeros((1, NC), jnp.float32)

    # module inputs: (1, B, S), squeezed to (B, S) inside forward
    input_ids = jax.random.randint(keys[5], (1, B, S), 0, VOCAB, jnp.int32)
    attention_mask = jnp.ones((1, B, S), jnp.int32)
    token_type_ids = jax.random.randint(keys[6], (1, B, S), 0, 2, jnp.int32)

    # forward: encoder stub (plain JAX) -> fused pooler+head Pallas kernel
    pre_pooled = bert_stub_pre_pooler(
        input_ids[0], attention_mask[0], token_type_ids[0], params)  # (B, H)
    out = where_number_forward(
        pre_pooled, params["pool_w"], params["pool_b"], w1, b1, w2, b2, NC)  # (NC,)
    jax.block_until_ready(out)

    # checks
    assert out.shape == (NC,)
    # log_softmax output must (approximately) sum to 1 after exp
    assert abs(float(jnp.sum(jnp.exp(out))) - 1.0) < 1e-4
    ref = reference_head(pre_pooled, params["pool_w"], params["pool_b"],
                         w1, b1, w2, b2)
    # approx reciprocal (EUP vrcp) perturbs low-order bits vs the f32 reference
    assert jnp.allclose(out, ref, atol=5e-3, rtol=5e-3), (out, ref)
    print("KERNEL_OK")
</pallas_src>

<mosaic_0001>
module attributes {stable_mosaic.version = 11 : i64} {
  func.func @where_number_kernel(%arg0: memref<8x128xf32, #tpu.memory_space<vmem>>, %arg1: memref<128x128xf32, #tpu.memory_space<vmem>>, %arg2: memref<1x128xf32, #tpu.memory_space<vmem>>, %arg3: memref<128x128xf32, #tpu.memory_space<vmem>>, %arg4: memref<1x128xf32, #tpu.memory_space<vmem>>, %arg5: memref<1x128xf32, #tpu.memory_space<vmem>>) attributes {dimension_semantics = [], scalar_prefetch = 0 : i64, scratch_operands = 0 : i64, tpu.core_type = #tpu.core_type<tc>} {
    %c0 = arith.constant 0 : index
    %c0_0 = arith.constant 0 : index
    %0 = vector.load %arg0[%c0, %c0_0] : memref<8x128xf32, #tpu.memory_space<vmem>>, vector<8x128xf32>
    %c0_1 = arith.constant 0 : index
    %c0_2 = arith.constant 0 : index
    %1 = vector.load %arg1[%c0_1, %c0_2] : memref<128x128xf32, #tpu.memory_space<vmem>>, vector<128x128xf32>
    %cst = arith.constant dense<0.000000e+00> : vector<8x128xf32>
    %2 = tpu.matmul %0, %1, %cst {dimension_numbers = #tpu.dot_dimension_numbers<[1], [0], [0], [1], [0, 0, 1, 1], [], []>} : vector<8x128xf32>, vector<128x128xf32>, vector<8x128xf32> -> vector<8x128xf32>
    %c0_3 = arith.constant 0 : index
    %c0_4 = arith.constant 0 : index
    %3 = vector.load %arg2[%c0_3, %c0_4] : memref<1x128xf32, #tpu.memory_space<vmem>>, vector<1x128xf32>
    %4 = vector.broadcast %3 : vector<1x128xf32> to vector<8x128xf32>
    %5 = arith.addf %2, %4 : vector<8x128xf32>
    %6 = math.tanh %5 : vector<8x128xf32>
    %c0_5 = arith.constant 0 : index
    %c0_6 = arith.constant 0 : index
    %7 = vector.load %arg3[%c0_5, %c0_6] : memref<128x128xf32, #tpu.memory_space<vmem>>, vector<128x128xf32>
    %cst_7 = arith.constant dense<0.000000e+00> : vector<8x128xf32>
    %8 = tpu.matmul %6, %7, %cst_7 {dimension_numbers = #tpu.dot_dimension_numbers<[1], [0], [0], [1], [0, 0, 1, 1], [], []>} : vector<8x128xf32>, vector<128x128xf32>, vector<8x128xf32> -> vector<8x128xf32>
    %c0_8 = arith.constant 0 : index
    %c0_9 = arith.constant 0 : index
    %9 = vector.load %arg4[%c0_8, %c0_9] : memref<1x128xf32, #tpu.memory_space<vmem>>, vector<1x128xf32>
    %10 = vector.broadcast %9 : vector<1x128xf32> to vector<8x128xf32>
    %11 = arith.addf %8, %10 : vector<8x128xf32>
    %12 = vector.extract_strided_slice %11 {offsets = [0, 0], sizes = [8, 1], strides = [1, 1]} : vector<8x128xf32> to vector<8x1xf32>
    %cst_10 = arith.constant dense<0xFF800000> : vector<1xf32>
    %13 = vector.multi_reduction <maximumf>, %12, %cst_10 [0] : vector<8x1xf32> to vector<1xf32>
    %14 = vector.shape_cast %13 : vector<1xf32> to vector<1x1xf32>
    %15 = vector.broadcast %14 : vector<1x1xf32> to vector<8x1xf32>
    %16 = arith.subf %12, %15 : vector<8x1xf32>
    %17 = math.exp %16 : vector<8x1xf32>
    %cst_11 = arith.constant dense<0.000000e+00> : vector<1xf32>
    %18 = vector.multi_reduction <add>, %17, %cst_11 [0] : vector<8x1xf32> to vector<1xf32>
    %19 = vector.shape_cast %18 : vector<1xf32> to vector<1x1xf32>
    %20 = tpu.reciprocal %19 {approx = true} : vector<1x1xf32> -> vector<1x1xf32>
    %21 = vector.broadcast %20 : vector<1x1xf32> to vector<8x1xf32>
    %22 = arith.mulf %17, %21 : vector<8x1xf32>
    %23 = arith.negf %11 : vector<8x128xf32>
    %24 = math.exp %23 : vector<8x128xf32>
    %cst_12 = arith.constant 1.000000e+00 : f32
    %25 = vector.broadcast %cst_12 : f32 to vector<8x128xf32>
    %26 = arith.addf %25, %24 : vector<8x128xf32>
    %27 = arith.divf %25, %26 : vector<8x128xf32>
    %28 = vector.broadcast %22 : vector<8x1xf32> to vector<8x128xf32>
    %29 = arith.mulf %28, %27 : vector<8x128xf32>
    %cst_13 = arith.constant dense<0.000000e+00> : vector<128xf32>
    %30 = vector.multi_reduction <add>, %29, %cst_13 [0] : vector<8x128xf32> to vector<128xf32>
    %31 = vector.shape_cast %30 : vector<128xf32> to vector<1x128xf32>
    %32 = tpu.iota {dimensions = array<i32: 1>} : vector<1x128xi32>
    %c1_i32 = arith.constant 1 : i32
    %33 = vector.broadcast %c1_i32 : i32 to vector<1x128xi32>
    %34 = arith.cmpi sge, %32, %33 : vector<1x128xi32>
    %c5_i32 = arith.constant 5 : i32
    %35 = vector.broadcast %c5_i32 : i32 to vector<1x128xi32>
    %36 = arith.cmpi slt, %32, %35 : vector<1x128xi32>
    %37 = arith.andi %34, %36 : vector<1x128xi1>
    %cst_14 = arith.constant 0xFF800000 : f32
    %38 = vector.broadcast %cst_14 : f32 to vector<1x128xf32>
    %39 = arith.select %37, %31, %38 : vector<1x128xi1>, vector<1x128xf32>
    %cst_15 = arith.constant dense<0xFF800000> : vector<1xf32>
    %40 = vector.multi_reduction <maximumf>, %39, %cst_15 [1] : vector<1x128xf32> to vector<1xf32>
    %41 = vector.shape_cast %40 : vector<1xf32> to vector<1x1xf32>
    %42 = vector.broadcast %41 : vector<1x1xf32> to vector<1x128xf32>
    %43 = arith.subf %39, %42 : vector<1x128xf32>
    %44 = math.exp %43 : vector<1x128xf32>
    %cst_16 = arith.constant 0.000000e+00 : f32
    %45 = vector.broadcast %cst_16 : f32 to vector<1x128xf32>
    %46 = arith.select %37, %44, %45 : vector<1x128xi1>, vector<1x128xf32>
    %cst_17 = arith.constant dense<0.000000e+00> : vector<1xf32>
    %47 = vector.multi_reduction <add>, %46, %cst_17 [1] : vector<1x128xf32> to vector<1xf32>
    %48 = vector.shape_cast %47 : vector<1xf32> to vector<1x1xf32>
    %49 = math.log %48 : vector<1x1xf32>
    %50 = vector.broadcast %49 : vector<1x1xf32> to vector<1x128xf32>
    %51 = arith.subf %43, %50 : vector<1x128xf32>
    %cst_18 = arith.constant 0.000000e+00 : f32
    %52 = vector.broadcast %cst_18 : f32 to vector<1x128xf32>
    %53 = arith.select %37, %51, %52 : vector<1x128xi1>, vector<1x128xf32>
    %c0_19 = arith.constant 0 : index
    %c0_20 = arith.constant 0 : index
    %54 = vector.load %arg5[%c0_19, %c0_20] : memref<1x128xf32, #tpu.memory_space<vmem>>, vector<1x128xf32>
    tpu.vector_store %arg5[%c0_19, %c0_20], %53 {strides = array<i32>} : memref<1x128xf32, #tpu.memory_space<vmem>>, vector<1x128xf32>,
    return
  }
}

</mosaic_0001>

<llo_original>
// kernel: tpu_custom_call.1
$region0: #{tpu_custom_call.1}
  #allocation0 [shape = 'u32[]', space=smem, size = 0x4, offset = 0x4, fixed_abs, tag = 'smem constant byte address 0x4 - core index']
  #allocation1 [shape = 'u32[144,128]{1,0:T(1,128)}', space=vmem, size = 0x12000, scoped, tag = 'internal scratch']
  %s0 = inlined_call_operand.hbm [shape: f32[8,128], index: 0, kind: input, shape index: {}]
  %s1 = inlined_call_operand.hbm [shape: f32[128,128], index: 1, kind: input, shape index: {}]
  %s2 = inlined_call_operand.vmem [shape: f32[1,128], index: 2, kind: input, shape index: {}]
  %s3 = inlined_call_operand.hbm [shape: f32[128,128], index: 3, kind: input, shape index: {}]
  %s4 = inlined_call_operand.vmem [shape: f32[1,128], index: 4, kind: input, shape index: {}]
  %s5 = inlined_call_operand.hbm [shape: f32[1,128], index: 5, kind: output, shape index: {}]
  %s6 = sld [smem:[#allocation0]]
  $region42: #{tpu_custom_call.1} parent=0
    _
  %s8 = ssub.s32 1, %s6
  %s9 = scalar_select 0, %s8, %s6
  $region1: #{tpu_custom_call.1} parent=0
    #allocation2 [shape = 'u8[4096]{0}', space=vmem, size = 0x1000, scoped, tag = 'input window, operand 0, single buffered']
    #allocation3 [shape = 's32[1]{0}', space=sflag, size = 0x4, scoped, tag = 'scoped memory for tpu_custom_call.1']
    #allocation4 [shape = 's32[1]{0}', space=sflag, size = 0x4, scoped, tag = 'scoped memory for tpu_custom_call.1']
    #allocation5 [shape = 'u8[65536]{0}', space=vmem, size = 0x10000, scoped, tag = 'input window, operand 1, single buffered']
    #allocation6 [shape = 's32[1]{0}', space=sflag, size = 0x4, scoped, tag = 'scoped memory for tpu_custom_call.1']
    #allocation7 [shape = 'u8[65536]{0}', space=vmem, size = 0x10000, scoped, tag = 'input window, operand 3, single buffered']
    #allocation8 [shape = 'u8[512]{0}', space=vmem, size = 0x400, scoped, tag = 'output window, operand 0, single buffered']
    %10 = vsyncpa [#allocation3], 0
    %11 = vsyncpa [#allocation6], 0
    %12 = vsyncpa [#allocation4], 0
    // Predicated region
    $region2: #{tpu_custom_call.1} parent=1 // pred_check
      _
    $region3: #{tpu_custom_call.1} parent=1 // pred_check_branch
      %14 = sbr.rel (0) target = $region5
    $region4: #{tpu_custom_call.1} parent=1 // pred_region
      %s16 = ssub.s32 128, 128
      %17 = vsyncadd [#allocation3], %s16
      %s19 = sshll.u32 [#allocation2], 4
      %s20 = int_to_ptr.vmem [resolvable:$true] %s19
      %22 = dma.hbm_to_vmem [thread:$0]  %s0, 128, %s20, [#allocation3]
    $region5: #{tpu_custom_call.1} parent=1 // pred_fallthru
      _
    // Predicated region
    $region6: #{tpu_custom_call.1} parent=1 // pred_check
      _
    $region7: #{tpu_custom_call.1} parent=1 // pred_check_branch
      %24 = sbr.rel (0) target = $region9
    $region8: #{tpu_custom_call.1} parent=1 // pred_region
      %s26 = ssub.s32 2048, 2048
      %27 = vsyncadd [#allocation6], %s26
      %s28 = sshll.u32 [#allocation5], 4
      %s29 = int_to_ptr.vmem [resolvable:$true] %s28
      %34 = dma.hbm_to_vmem [thread:$0]  %s1, 2048, %s29, [#allocation6], 128, 128, 8
    $region9: #{tpu_custom_call.1} parent=1 // pred_fallthru
      _
    // Predicated region
    $region10: #{tpu_custom_call.1} parent=1 // pred_check
      _
    $region11: #{tpu_custom_call.1} parent=1 // pred_check_branch
      %36 = sbr.rel (0) target = $region13
    $region12: #{tpu_custom_call.1} parent=1 // pred_region
      _
    $region13: #{tpu_custom_call.1} parent=1 // pred_fallthru
      _
    // Predicated region
    $region14: #{tpu_custom_call.1} parent=1 // pred_check
      _
    $region15: #{tpu_custom_call.1} parent=1 // pred_check_branch
      %38 = sbr.rel (0) target = $region17
    $region16: #{tpu_custom_call.1} parent=1 // pred_region
      %s40 = ssub.s32 2048, 2048
      %41 = vsyncadd [#allocation6], %s40
      %s42 = sshll.u32 [#allocation7], 4
      %s43 = int_to_ptr.vmem [resolvable:$true] %s42
      %48 = dma.hbm_to_vmem [thread:$0]  %s3, 2048, %s43, [#allocation6], 128, 128, 8
    $region17: #{tpu_custom_call.1} parent=1 // pred_fallthru
      _
    // Predicated region
    $region18: #{tpu_custom_call.1} parent=1 // pred_check
      _
    $region19: #{tpu_custom_call.1} parent=1 // pred_check_branch
      %50 = sbr.rel (0) target = $region21
    $region20: #{tpu_custom_call.1} parent=1 // pred_region
      _
    $region21: #{tpu_custom_call.1} parent=1 // pred_fallthru
      _
    // Predicated region
    $region22: #{tpu_custom_call.1} parent=1 // pred_check
      _
    $region23: #{tpu_custom_call.1} parent=1 // pred_check_branch
      %52 = sbr.rel (0) target = $region25
    $region24: #{tpu_custom_call.1} parent=1 // pred_region
      %53 = dma.done [#allocation3], 128
    $region25: #{tpu_custom_call.1} parent=1 // pred_fallthru
      _
    // Predicated region
    $region26: #{tpu_custom_call.1} parent=1 // pred_check
      _
    $region27: #{tpu_custom_call.1} parent=1 // pred_check_branch
      %55 = sbr.rel (0) target = $region29
    $region28: #{tpu_custom_call.1} parent=1 // pred_region
      %56 = dma.done [#allocation6], 2048
    $region29: #{tpu_custom_call.1} parent=1 // pred_fallthru
      _
    // Predicated region
    $region30: #{tpu_custom_call.1} parent=1 // pred_check
      _
    $region31: #{tpu_custom_call.1} parent=1 // pred_check_branch
      %58 = sbr.rel (0) target = $region33
    $region32: #{tpu_custom_call.1} parent=1 // pred_region
      %59 = dma.done [#allocation6], 2048
    $region33: #{tpu_custom_call.1} parent=1 // pred_fallthru
      _
    %v60 = vld [vmem:[#allocation2] sm:$0xff]
    %v61 = vld [vmem:[#allocation5] sm:$0xff]
    %v62 = vld [vmem:[#allocation5 + $0x8] sm:$0xff]
    %v63 = vld [vmem:[#allocation5 + $0x10] sm:$0xff]
    %v64 = vld [vmem:[#allocation5 + $0x18] sm:$0xff]
    %v65 = vld [vmem:[#allocation5 + $0x20] sm:$0xff]
    %v66 = vld [vmem:[#allocation5 + $0x28] sm:$0xff]
    %v67 = vld [vmem:[#allocation5 + $0x30] sm:$0xff]
    %v68 = vld [vmem:[#allocation5 + $0x38] sm:$0xff]
    %v69 = vld [vmem:[#allocation5 + $0x40] sm:$0xff]
    %v70 = vld [vmem:[#allocation5 + $0x48] sm:$0xff]
    %v71 = vld [vmem:[#allocation5 + $0x50] sm:$0xff]
    %v72 = vld [vmem:[#allocation5 + $0x58] sm:$0xff]
    %v73 = vld [vmem:[#allocation5 + $0x60] sm:$0xff]
    %v74 = vld [vmem:[#allocation5 + $0x68] sm:$0xff]
    %v75 = vld [vmem:[#allocation5 + $0x70] sm:$0xff]
    %v76 = vld [vmem:[#allocation5 + $0x78] sm:$0xff]
    %v77 = vld [vmem:[%s2] sm:$0x1]
    %v79 = vlaneseq
    %v80 = vshrl.u32 %v79, 7
    %v81 = vsub.s32 0, %v80
    %v82 = vrot.slane %v77, %v81
    %84 = vmatprep.subr.mxu0 0.0
    %85 = vmatpush1.msra.mxu0 %v61
    %86 = vmatprep.subr.mxu0 0.0
    %87 = vmatpush1.msra.mxu0 %v62
    %88 = vmatprep.subr.mxu0 0.0
    %89 = vmatpush1.msra.mxu0 %v63
    %90 = vmatprep.subr.mxu0 0.0
    %91 = vmatpush1.msra.mxu0 %v64
    %92 = vmatprep.subr.mxu0 0.0
    %93 = vmatpush1.msra.mxu0 %v65
    %94 = vmatprep.subr.mxu0 0.0
    %95 = vmatpush1.msra.mxu0 %v66
    %96 = vmatprep.subr.mxu0 0.0
    %97 = vmatpush1.msra.mxu0 %v67
    %98 = vmatprep.subr.mxu0 0.0
    %99 = vmatpush1.msra.mxu0 %v68
    %100 = vmatprep.subr.mxu0 0.0
    %101 = vmatpush1.msra.mxu0 %v69
    %102 = vmatprep.subr.mxu0 0.0
    %103 = vmatpush1.msra.mxu0 %v70
    %104 = vmatprep.subr.mxu0 0.0
    %105 = vmatpush1.msra.mxu0 %v71
    %106 = vmatprep.subr.mxu0 0.0
    %107 = vmatpush1.msra.mxu0 %v72
    %108 = vmatprep.subr.mxu0 0.0
    %109 = vmatpush1.msra.mxu0 %v73
    %110 = vmatprep.subr.mxu0 0.0
    %111 = vmatpush1.msra.mxu0 %v74
    %112 = vmatprep.subr.mxu0 0.0
    %113 = vmatpush1.msra.mxu0 %v75
    %114 = vmatprep.subr.mxu0 0.0
    %115 = vmatpush1.msra.mxu0 %v76
    %116 = vmatprep.subr.mxu0 0.0
    %117 = vmatpush1.msra.mxu0 0.0
    %118 = vmatprep.subr.mxu0 0.0
    %119 = vmatpush1.msra.mxu0 0.0
    %120 = vmatprep.subr.mxu0 0.0
    %121 = vmatpush1.msra.mxu0 0.0
    %122 = vmatprep.subr.mxu0 0.0
    %123 = vmatpush1.msra.mxu0 0.0
    %124 = vmatprep.subr.mxu0 0.0
    %125 = vmatpush1.msra.mxu0 0.0
    %126 = vmatprep.subr.mxu0 0.0
    %127 = vmatpush1.msra.mxu0 0.0
    %128 = vmatprep.subr.mxu0 0.0
    %129 = vmatpush1.msra.mxu0 0.0
    %130 = vmatprep.subr.mxu0 0.0
    %131 = vmatpush1.msra.mxu0 0.0
    %132 = vmatprep.subr.mxu0 0.0
    %133 = vmatpush1.msra.mxu0 0.0
    %134 = vmatprep.subr.mxu0 0.0
    %135 = vmatpush1.msra.mxu0 0.0
    %136 = vmatprep.subr.mxu0 0.0
    %137 = vmatpush1.msra.mxu0 0.0
    %138 = vmatprep.subr.mxu0 0.0
    %139 = vmatpush1.msra.mxu0 0.0
    %140 = vmatprep.subr.mxu0 0.0
    %141 = vmatpush1.msra.mxu0 0.0
    %142 = vmatprep.subr.mxu0 0.0
    %143 = vmatpush1.msra.mxu0 0.0
    %144 = vmatprep.subr.mxu0 0.0
    %145 = vmatpush1.msra.mxu0 0.0
    %146 = vmatprep.subr.mxu0 0.0
    %147 = vmatpush1.msra.mxu0 0.0
    %148 = vmatprep.mubr.f32.mxu0 0.0
    %149 = vmatmul.mubr.f32.gmra.mrb[0].mxu0 %v60
    %v150 = vpop.f32.mrb[0].mxu0
    %v151 = vadd.f32 %v82, %v150
    %v152 = vpop.f32.mrb[0].mxu0
    %153 = vdwg.mxu0
    %v154 = vtanh.pop %v151
    %v155 = vld [vmem:[#allocation7] sm:$0xff]
    %v156 = vld [vmem:[#allocation7 + $0x8] sm:$0xff]
    %v157 = vld [vmem:[#allocation7 + $0x10] sm:$0xff]
    %v158 = vld [vmem:[#allocation7 + $0x18] sm:$0xff]
    %v159 = vld [vmem:[#allocation7 + $0x20] sm:$0xff]
    %v160 = vld [vmem:[#allocation7 + $0x28] sm:$0xff]
    %v161 = vld [vmem:[#allocation7 + $0x30] sm:$0xff]
    %v162 = vld [vmem:[#allocation7 + $0x38] sm:$0xff]
    %v163 = vld [vmem:[#allocation7 + $0x40] sm:$0xff]
    %v164 = vld [vmem:[#allocation7 + $0x48] sm:$0xff]
    %v165 = vld [vmem:[#allocation7 + $0x50] sm:$0xff]
    %v166 = vld [vmem:[#allocation7 + $0x58] sm:$0xff]
    %v167 = vld [vmem:[#allocation7 + $0x60] sm:$0xff]
    %v168 = vld [vmem:[#allocation7 + $0x68] sm:$0xff]
    %v169 = vld [vmem:[#allocation7 + $0x70] sm:$0xff]
    %v170 = vld [vmem:[#allocation7 + $0x78] sm:$0xff]
    %v171 = vld [vmem:[%s4] sm:$0x1]
    %v173 = vlaneseq
    %v174 = vshrl.u32 %v173, 7
    %v175 = vsub.s32 0, %v174
    %v176 = vrot.slane %v171, %v175
    %178 = vmatprep.subr.mxu0 0.0
    %179 = vmatpush1.msra.mxu0 %v155
    %180 = vmatprep.subr.mxu0 0.0
    %181 = vmatpush1.msra.mxu0 %v156
    %182 = vmatprep.subr.mxu0 0.0
    %183 = vmatpush1.msra.mxu0 %v157
    %184 = vmatprep.subr.mxu0 0.0
    %185 = vmatpush1.msra.mxu0 %v158
    %186 = vmatprep.subr.mxu0 0.0
    %187 = vmatpush1.msra.mxu0 %v159
    %188 = vmatprep.subr.mxu0 0.0
    %189 = vmatpush1.msra.mxu0 %v160
    %190 = vmatprep.subr.mxu0 0.0
    %191 = vmatpush1.msra.mxu0 %v161
    %192 = vmatprep.subr.mxu0 0.0
    %193 = vmatpush1.msra.mxu0 %v162
    %194 = vmatprep.subr.mxu0 0.0
    %195 = vmatpush1.msra.mxu0 %v163
    %196 = vmatprep.subr.mxu0 0.0
    %197 = vmatpush1.msra.mxu0 %v164
    %198 = vmatprep.subr.mxu0 0.0
    %199 = vmatpush1.msra.mxu0 %v165
    %200 = vmatprep.subr.mxu0 0.0
    %201 = vmatpush1.msra.mxu0 %v166
    %202 = vmatprep.subr.mxu0 0.0
    %203 = vmatpush1.msra.mxu0 %v167
    %204 = vmatprep.subr.mxu0 0.0
    %205 = vmatpush1.msra.mxu0 %v168
    %206 = vmatprep.subr.mxu0 0.0
    %207 = vmatpush1.msra.mxu0 %v169
    %208 = vmatprep.subr.mxu0 0.0
    %209 = vmatpush1.msra.mxu0 %v170
    %210 = vmatprep.subr.mxu0 0.0
    %211 = vmatpush1.msra.mxu0 0.0
    %212 = vmatprep.subr.mxu0 0.0
    %213 = vmatpush1.msra.mxu0 0.0
    %214 = vmatprep.subr.mxu0 0.0
    %215 = vmatpush1.msra.mxu0 0.0
    %216 = vmatprep.subr.mxu0 0.0
    %217 = vmatpush1.msra.mxu0 0.0
    %218 = vmatprep.subr.mxu0 0.0
    %219 = vmatpush1.msra.mxu0 0.0
    %220 = vmatprep.subr.mxu0 0.0
    %221 = vmatpush1.msra.mxu0 0.0
    %222 = vmatprep.subr.mxu0 0.0
    %223 = vmatpush1.msra.mxu0 0.0
    %224 = vmatprep.subr.mxu0 0.0
    %225 = vmatpush1.msra.mxu0 0.0
    %226 = vmatprep.subr.mxu0 0.0
    %227 = vmatpush1.msra.mxu0 0.0
    %228 = vmatprep.subr.mxu0 0.0
    %229 = vmatpush1.msra.mxu0 0.0
    %230 = vmatprep.subr.mxu0 0.0
    %231 = vmatpush1.msra.mxu0 0.0
    %232 = vmatprep.subr.mxu0 0.0
    %233 = vmatpush1.msra.mxu0 0.0
    %234 = vmatprep.subr.mxu0 0.0
    %235 = vmatpush1.msra.mxu0 0.0
    %236 = vmatprep.subr.mxu0 0.0
    %237 = vmatpush1.msra.mxu0 0.0
    %238 = vmatprep.subr.mxu0 0.0
    %239 = vmatpush1.msra.mxu0 0.0
    %240 = vmatprep.subr.mxu0 0.0
    %241 = vmatpush1.msra.mxu0 0.0
    %242 = vmatprep.mubr.f32.mxu0 0.0
    %243 = vmatmul.mubr.f32.gmra.mrb[0].mxu0 %v154
    %v244 = vpop.f32.mrb[0].mxu0
    %v245 = vadd.f32 %v176, %v244
    %v246 = vpop.f32.mrb[0].mxu0
    %247 = vdwg.mxu0
    %vm248 = vcmask 7168
    %v249 = vsel %vm248, %v245, -inf
    %v250 = vrot.slane %v249, 4
    %v251 = vmax.f32 %v249, %v250
    %v252 = vrot.slane %v251, 2
    %v253 = vmax.f32 %v251, %v252
    %v254 = vrot.slane %v253, 1
    %v255 = vmax.f32 %v253, %v254
    %v256 = vsub.f32 %v245, %v255
    %v257 = vmul.f32 %v256, 1.442695
    %v258 = vpow.pop %v257
    %v259 = vsel %vm248, %v258, 0.0
    %v260 = vrot.slane %v259, 4
    %v261 = vadd.f32 %v259, %v260
    %v262 = vrot.slane %v261, 2
    %v263 = vadd.f32 %v261, %v262
    %v264 = vrot.slane %v263, 1
    %v265 = vadd.f32 %v263, %v264
    %v266 = vrcp.pop %v265
    %v267 = vmul.f32 %v258, %v266
    %v268 = vxor.u32 %v245, 2147483648
    %v269 = vmul.f32 %v268, 1.442695
    %v270 = vpow.pop %v269
    %v271 = vadd.f32 %v270, 1.0
    %v272 = vrcp.pop %v271
    %v273 = vmul.f32 1.0, %v272
    %275 = vset.pattern.permute.xlu0 0
    %276 = vperm.xlu0 %275, %v267
    %v277 = vpop.permute.xlu0 %276
    %v279 = vmul.f32 %v277, %v273
    %v280 = vrot.slane %v279, 4
    %v281 = vadd.f32 %v279, %v280
    %v282 = vrot.slane %v281, 2
    %v283 = vadd.f32 %v281, %v282
    %v284 = vrot.slane %v283, 1
    %v285 = vadd.f32 %v283, %v284
    %v286 = vlaneseq
    %v287 = vand.u32 %v286, 127
    %vm288 = vcmp.ge.s32.totalorder %v287, 1
    %vm289 = vcmp.lt.s32.totalorder %v287, 5
    %vm290 = vmand %vm288, %vm289
    %v291 = vsel %vm290, %v285, -inf
    %292 = vmax.xlane.f32.xlu0 %v291
    %v293 = vpop.xlane.xlu0 %292
    %v294 = vsub.f32 %v291, %v293
    %v295 = vmul.f32 %v294, 1.442695
    %v296 = vpow.pop %v295
    %v297 = vsel %vm290, %v296, 0.0
    %298 = vadd.xlane.f32.xlu0 %v297
    %v299 = vpop.xlane.xlu0 %298
    %v300 = vlog2.pop %v299
    %v301 = vmul.f32 %v300, 0.6931472
    %v302 = vsub.f32 %v294, %v301
    %v303 = vsel %vm290, %v302, 0.0
    %304 = vst [vmem:[#allocation8] sm:$0x1] %v303
    // Predicated region
    $region34: #{tpu_custom_call.1} parent=1 // pred_check
      _
    $region35: #{tpu_custom_call.1} parent=1 // pred_check_branch
      %306 = sbr.rel (0) target = $region37
    $region36: #{tpu_custom_call.1} parent=1 // pred_region
      %s308 = ssub.s32 16, 16
      %309 = vsyncadd [#allocation4], %s308
      %s311 = sshll.u32 [#allocation8], 4
      %s312 = int_to_ptr.vmem [resolvable:$true] %s311
      %314 = dma.vmem_to_hbm [thread:$0]  %s312, 16, %s5, [#allocation4]
    $region37: #{tpu_custom_call.1} parent=1 // pred_fallthru
      _
    // Predicated region
    $region38: #{tpu_custom_call.1} parent=1 // pred_check
      _
    $region39: #{tpu_custom_call.1} parent=1 // pred_check_branch
      %316 = sbr.rel (0) target = $region41
    $region40: #{tpu_custom_call.1} parent=1 // pred_region
      %317 = dma.done [#allocation4], 16
    $region41: #{tpu_custom_call.1} parent=1 // pred_fallthru
      _
    %318 = vsyncpa [#allocation3], 1
    %319 = vsyncpa [#allocation6], 1
    %320 = vsyncpa [#allocation4], 1

</llo_original>
